<compile_context>
chip_gen: v5e
topology: v5e:2x2
jax: 0.10.0
libtpu: 0.0.40
codegen_flags: <defaults>
</compile_context>

<pallas_src>
import functools
import json

import jax
import jax.numpy as jnp
from jax.experimental import pallas as pl
from jax.experimental.pallas import tpu as pltpu

EPS = 1e-5

# VMEM working-set budget used to size tiles.  Leaves headroom under v7x's 64 MiB/TC and
# is requested explicitly via vmem_limit_bytes (so v5e/v6e scoped defaults don't matter).
_VMEM_BUDGET = 40 * 1024 * 1024


def _round_up(x, m):
    return (x + m - 1) // m * m


def _round_down(x, m):
    return x // m * m


# --------------------------------------------------------------------------------------
# Path A: each grid step owns `tb` full (n, c) rows; H*W entirely on the lane axis.
# --------------------------------------------------------------------------------------
def _cin_rows_kernel(x_ref, ss_ref, o_ref, *, hw, tb, ss_resident):
    # x_ref: (tb, HW)  rows = flattened (n, c) instances, full H*W on the lanes.
    # ss_ref: (R_pad, 2) resident strip or (tb, 2) per-tile; col 0 = gamma, col 1 = beta.
    x = x_ref[...].astype(jnp.float32)
    inv_hw = 1.0 / float(hw)

    # Two-pass (centered) statistics: the whole row is resident in VMEM, so the second
    # pass is VMEM-only and avoids E[x^2] - E[x]^2 cancellation.
    mean = jnp.sum(x, axis=-1, keepdims=True) * inv_hw
    xc = x - mean
    var = jnp.sum(xc * xc, axis=-1, keepdims=True) * inv_hw
    rstd = jax.lax.rsqrt(var + EPS)

    if ss_resident:
        row0 = pl.multiple_of(pl.program_id(0) * tb, tb)
        gb = ss_ref[pl.ds(row0, tb), :]
    else:
        gb = ss_ref[...]
    gamma = gb[:, 0:1]
    beta = gb[:, 1:2]

    # Fused normalize + affine: out = (x - mean) * (gamma * rstd) + beta.
    o_ref[...] = (xc * (gamma * rstd) + beta).astype(o_ref.dtype)


# --------------------------------------------------------------------------------------
# Path B (large H*W): chunk the reduction axis.  Pass 1 accumulates per-row sums and
# emits (a, b) = (gamma*rstd, beta - mean*a); pass 2 applies out = x*a + b.
# --------------------------------------------------------------------------------------
def _cin_stats_kernel(x_ref, ss_ref, ab_ref, s1_ref, s2_ref, *, hw, hc, mask_tail):
    j = pl.program_id(1)

    @pl.when(j == 0)
    def _():
        s1_ref[...] = jnp.zeros_like(s1_ref)
        s2_ref[...] = jnp.zeros_like(s2_ref)

    x = x_ref[...].astype(jnp.float32)
    if mask_tail:
        # Last H*W chunk extends past the array; zero the ragged lanes so sums are exact.
        col = jax.lax.broadcasted_iota(jnp.int32, x.shape, 1) + j * hc
        x = jnp.where(col < hw, x, 0.0)
    s1_ref[...] += jnp.sum(x, axis=-1, keepdims=True)
    s2_ref[...] += jnp.sum(x * x, axis=-1, keepdims=True)

    @pl.when(j == pl.num_programs(1) - 1)
    def _():
        inv_hw = 1.0 / float(hw)
        mean = s1_ref[...] * inv_hw
        var = jnp.maximum(s2_ref[...] * inv_hw - mean * mean, 0.0)
        rstd = jax.lax.rsqrt(var + EPS)
        gamma = ss_ref[:, 0:1]
        beta = ss_ref[:, 1:2]
        a = gamma * rstd
        ab_ref[:, 0:1] = a
        ab_ref[:, 1:2] = beta - mean * a


def _cin_apply_kernel(x_ref, ab_ref, o_ref):
    x = x_ref[...].astype(jnp.float32)
    o_ref[...] = (x * ab_ref[:, 0:1] + ab_ref[:, 1:2]).astype(o_ref.dtype)


def conditional_instance_norm_2d(x, gamma, beta, *, vmem_budget_bytes=_VMEM_BUDGET):
    """x: (N, C, H, W); gamma, beta: (N, C).  Returns (N, C, H, W)."""
    N, C, H, W = x.shape
    assert gamma.shape == (N, C) and beta.shape == (N, C), (
        "style batch (len(config)) must equal the input batch N")

    HW = H * W
    R = N * C
    itemsize = jnp.dtype(x.dtype).itemsize
    row_align = 8 if itemsize >= 4 else 16  # sublane packing for narrow dtypes

    # Layout-preserving views only -- no HBM pad/slice passes for x.
    x_flat = x.reshape(R, HW)
    ss = jnp.stack([gamma.reshape(R), beta.reshape(R)], axis=-1).astype(jnp.float32)

    # Live VMEM per tile row ~= 4x input-dtype bytes (double-buffered in + out)
    # + 4x f32 bytes (upcast / centered copy / result-before-cast temporaries).
    per_row_vmem = HW * (4 * itemsize + 4 * 4)
    vmem_limit = int(min(max(vmem_budget_bytes, 16 * 1024 * 1024), 60 * 1024 * 1024))

    if row_align * per_row_vmem <= vmem_budget_bytes:
        # -------- Path A: full H*W per row tile, 1-D row grid ------------------------
        tb = max(row_align, _round_down(vmem_budget_bytes // per_row_vmem, row_align))
        # Keep >= 4 grid steps when possible so v7x's two TensorCores both get work.
        if R > 4 * row_align:
            tb = min(tb, max(row_align, _round_down(R // 4, row_align)))
        if tb >= R:
            tb = R  # single block; block dim == full array dim is always allowed
        grid = (pl.cdiv(R, tb),)

        # gamma/beta strip: resident (same block every step -> one DMA) when the grid has
        # multiple steps and the strip is small; otherwise stream (tb, 2) tiles.
        ss_resident = grid[0] > 1 and R <= 1024
        if ss_resident:
            r_pad = grid[0] * tb
            if r_pad != R:
                ss = jnp.pad(ss, ((0, r_pad - R), (0, 0)))  # tiny (R, 2) pad only
            ss_spec = pl.BlockSpec((r_pad, 2), lambda i: (0, 0))
        else:
            ss_spec = pl.BlockSpec((tb, 2), lambda i: (i, 0))

        out_flat = pl.pallas_call(
            functools.partial(_cin_rows_kernel, hw=HW, tb=tb, ss_resident=ss_resident),
            out_shape=jax.ShapeDtypeStruct((R, HW), x.dtype),
            grid_spec=pltpu.PrefetchScalarGridSpec(
                num_scalar_prefetch=0,
                grid=grid,
                in_specs=[pl.BlockSpec((tb, HW), lambda i: (i, 0)), ss_spec],
                out_specs=pl.BlockSpec((tb, HW), lambda i: (i, 0)),
            ),
            compiler_params=pltpu.CompilerParams(
                dimension_semantics=("parallel",),
                vmem_limit_bytes=vmem_limit,
            ),
        )(x_flat, ss)
    else:
        # -------- Path B: chunk the H*W reduction axis (large images) ----------------
        tb = row_align if R >= row_align else R
        hc = max(128, _round_down(vmem_budget_bytes // (tb * (4 * itemsize + 4 * 4)), 128))
        hc = min(hc, _round_up(HW, 128))
        grid = (pl.cdiv(R, tb), pl.cdiv(HW, hc))

        # Pass 1: per-row (a, b) with gamma/beta folded in.
        ab = pl.pallas_call(
            functools.partial(_cin_stats_kernel, hw=HW, hc=hc, mask_tail=HW % hc != 0),
            out_shape=jax.ShapeDtypeStruct((R, 2), jnp.float32),
            grid_spec=pltpu.PrefetchScalarGridSpec(
                num_scalar_prefetch=0,
                grid=grid,
                in_specs=[pl.BlockSpec((tb, hc), lambda i, j: (i, j)),
                          pl.BlockSpec((tb, 2), lambda i, j: (i, 0))],
                out_specs=pl.BlockSpec((tb, 2), lambda i, j: (i, 0)),
                scratch_shapes=[pltpu.VMEM((tb, 1), jnp.float32),
                                pltpu.VMEM((tb, 1), jnp.float32)],
            ),
            compiler_params=pltpu.CompilerParams(
                dimension_semantics=("parallel", "arbitrary"),
                vmem_limit_bytes=vmem_limit,
            ),
        )(x_flat, ss)

        # Pass 2: out = x * a + b.
        out_flat = pl.pallas_call(
            _cin_apply_kernel,
            out_shape=jax.ShapeDtypeStruct((R, HW), x.dtype),
            grid_spec=pltpu.PrefetchScalarGridSpec(
                num_scalar_prefetch=0,
                grid=grid,
                in_specs=[pl.BlockSpec((tb, hc), lambda i, j: (i, j)),
                          pl.BlockSpec((tb, 2), lambda i, j: (i, 0))],
                out_specs=pl.BlockSpec((tb, hc), lambda i, j: (i, j)),
            ),
            compiler_params=pltpu.CompilerParams(
                dimension_semantics=("parallel", "parallel"),
                vmem_limit_bytes=vmem_limit,
            ),
        )(x_flat, ab)

    return out_flat.reshape(N, C, H, W)


class ConditionalInstanceNorm2dPallas:
    """JAX/Pallas port. `config` is a list of (style_id, weight) pairs (weight is unused
    in forward, matching the PyTorch module)."""

    def __init__(self, in_channels, config, key):
        self.config = config
        self.style_num = len(config)
        self.num_features = in_channels
        # Embedding(style_num, 2*C): first C cols ~ N(1, 0.02), last C cols zero.
        k = jax.random.normal(key, (self.style_num, in_channels), dtype=jnp.float32)
        gamma_part = 1.0 + 0.02 * k
        beta_part = jnp.zeros((self.style_num, in_channels), dtype=jnp.float32)
        self.embed_weight = jnp.concatenate([gamma_part, beta_part], axis=1)  # (S, 2C)

    def __call__(self, x):
        ids = jnp.array([sid for sid, _w in self.config], dtype=jnp.int32)  # (S,)
        emb = self.embed_weight[ids]  # (S, 2C) -- tiny gather stays in plain JAX
        gamma = emb[:, : self.num_features]
        beta = emb[:, self.num_features:]
        # As in the PyTorch module, one style per batch element (S must equal N).
        return conditional_instance_norm_2d(x, gamma, beta)


def _reference(x, gamma, beta):
    x32 = x.astype(jnp.float32)
    mean = jnp.mean(x32, axis=(2, 3), keepdims=True)
    var = jnp.mean((x32 - mean) ** 2, axis=(2, 3), keepdims=True)
    y = (x32 - mean) / jnp.sqrt(var + EPS)
    return gamma[:, :, None, None] * y + beta[:, :, None, None]


if __name__ == "__main__":
    key = jax.random.PRNGKey(0)
    k_x, k_emb, k_x2, k_x3, k_x4 = jax.random.split(key, 5)

    # 1) Module-level case: aligned H*W (256), single-block row path.
    N, C, H, W = 2, 4, 16, 16
    config = json.loads('[[0, 1.0], [1, 0.5]]')  # (style_id, weight) pairs
    x = jax.random.normal(k_x, (N, C, H, W), dtype=jnp.float32)
    module = ConditionalInstanceNorm2dPallas(C, config, k_emb)
    out = jax.block_until_ready(module(x))

    ids = jnp.array([sid for sid, _w in config], dtype=jnp.int32)
    emb = module.embed_weight[ids]
    ref = _reference(x, emb[:, :C], emb[:, C:])
    assert out.shape == (N, C, H, W)
    assert jnp.max(jnp.abs(out - ref)) < 1e-4

    # 2) Unaligned case: H*W = 100 (not a 128 multiple), N*C = 6 (not an 8 multiple)
    #    -- exercises the no-pad ragged-edge handling.
    x2 = jax.random.normal(k_x2, (2, 3, 10, 10), dtype=jnp.float32)
    g2 = 1.0 + 0.02 * jax.random.normal(k_emb, (2, 3), dtype=jnp.float32)
    b2 = jnp.zeros((2, 3), dtype=jnp.float32)
    out2 = jax.block_until_ready(conditional_instance_norm_2d(x2, g2, b2))
    assert jnp.max(jnp.abs(out2 - _reference(x2, g2, b2))) < 1e-4

    # 3) Multi-step row grid (N*C = 64) -- exercises the resident gamma/beta strip
    #    and the v7x load-balance tb clamp.
    x4 = jax.random.normal(k_x4, (4, 16, 8, 8), dtype=jnp.float32)
    g4 = 1.0 + 0.02 * jax.random.normal(k_emb, (4, 16), dtype=jnp.float32)
    b4 = 0.1 * jax.random.normal(k_x4, (4, 16), dtype=jnp.float32)
    out4 = jax.block_until_ready(conditional_instance_norm_2d(x4, g4, b4))
    assert jnp.max(jnp.abs(out4 - _reference(x4, g4, b4))) < 1e-4

    # 4) Force the chunked large-H*W two-pass path with a tiny budget so it is
    #    exercised at a small shape (H*W = 324, chunk = 128, ragged masked tail).
    x3 = jax.random.normal(k_x3, (2, 4, 18, 18), dtype=jnp.float32)
    g3 = 1.0 + 0.02 * jax.random.normal(k_emb, (2, 4), dtype=jnp.float32)
    b3 = 0.1 * jax.random.normal(k_x3, (2, 4), dtype=jnp.float32)
    out3 = jax.block_until_ready(
        conditional_instance_norm_2d(x3, g3, b3, vmem_budget_bytes=32 * 1024))
    assert jnp.max(jnp.abs(out3 - _reference(x3, g3, b3))) < 1e-4

    print("KERNEL_OK")
</pallas_src>

<mosaic_0001>
module attributes {stable_mosaic.version = 11 : i64} {
  func.func @_cin_rows_kernel(%arg0: i32, %arg1: memref<8x256xf32, #tpu.memory_space<vmem>>, %arg2: memref<8x2xf32, #tpu.memory_space<vmem>>, %arg3: memref<8x256xf32, #tpu.memory_space<vmem>>) attributes {dimension_semantics = [#tpu.dimension_semantics<parallel>], iteration_bounds = array<i64: 1>, scalar_prefetch = 0 : i64, scratch_operands = 0 : i64, tpu.core_type = #tpu.core_type<tc>, window_params = [{transform_indices = @transform_0, window_bounds = array<i64: 8, 256>}, {transform_indices = @transform_1, window_bounds = array<i64: 8, 2>}, {transform_indices = @transform_2, window_bounds = array<i64: 8, 256>}]} {
    %c0 = arith.constant 0 : index
    %c0_0 = arith.constant 0 : index
    %0 = vector.load %arg1[%c0, %c0_0] : memref<8x256xf32, #tpu.memory_space<vmem>>, vector<8x256xf32>
    %cst = arith.constant dense<0.000000e+00> : vector<8xf32>
    %1 = vector.multi_reduction <add>, %0, %cst [1] : vector<8x256xf32> to vector<8xf32>
    %2 = vector.shape_cast %1 : vector<8xf32> to vector<8x1xf32>
    %cst_1 = arith.constant 3.906250e-03 : f32
    %3 = vector.broadcast %cst_1 : f32 to vector<8x1xf32>
    %4 = arith.mulf %2, %3 : vector<8x1xf32>
    %5 = vector.broadcast %4 : vector<8x1xf32> to vector<8x256xf32>
    %6 = arith.subf %0, %5 : vector<8x256xf32>
    %7 = arith.mulf %6, %6 : vector<8x256xf32>
    %cst_2 = arith.constant dense<0.000000e+00> : vector<8xf32>
    %8 = vector.multi_reduction <add>, %7, %cst_2 [1] : vector<8x256xf32> to vector<8xf32>
    %9 = vector.shape_cast %8 : vector<8xf32> to vector<8x1xf32>
    %cst_3 = arith.constant 3.906250e-03 : f32
    %10 = vector.broadcast %cst_3 : f32 to vector<8x1xf32>
    %11 = arith.mulf %9, %10 : vector<8x1xf32>
    %cst_4 = arith.constant 9.99999974E-6 : f32
    %12 = vector.broadcast %cst_4 : f32 to vector<8x1xf32>
    %13 = arith.addf %11, %12 : vector<8x1xf32>
    %14 = math.rsqrt %13 : vector<8x1xf32>
    %c0_5 = arith.constant 0 : index
    %c0_6 = arith.constant 0 : index
    %15 = vector.load %arg2[%c0_5, %c0_6] : memref<8x2xf32, #tpu.memory_space<vmem>>, vector<8x2xf32>
    %16 = vector.extract_strided_slice %15 {offsets = [0, 0], sizes = [8, 1], strides = [1, 1]} : vector<8x2xf32> to vector<8x1xf32>
    %17 = vector.extract_strided_slice %15 {offsets = [0, 1], sizes = [8, 1], strides = [1, 1]} : vector<8x2xf32> to vector<8x1xf32>
    %18 = arith.mulf %16, %14 : vector<8x1xf32>
    %19 = vector.broadcast %18 : vector<8x1xf32> to vector<8x256xf32>
    %20 = arith.mulf %6, %19 : vector<8x256xf32>
    %21 = vector.broadcast %17 : vector<8x1xf32> to vector<8x256xf32>
    %22 = arith.addf %20, %21 : vector<8x256xf32>
    %c0_7 = arith.constant 0 : index
    %c0_8 = arith.constant 0 : index
    %23 = vector.load %arg3[%c0_7, %c0_8] : memref<8x256xf32, #tpu.memory_space<vmem>>, vector<8x256xf32>
    tpu.vector_store %arg3[%c0_7, %c0_8], %22 {strides = array<i32>} : memref<8x256xf32, #tpu.memory_space<vmem>>, vector<8x256xf32>,
    return
  }
  func.func @transform_0(%arg0: i32) -> (i32, i32) {
    %c0_i32 = arith.constant 0 : i32
    %c0_i32_0 = arith.constant 0 : i32
    return %arg0, %c0_i32 : i32, i32
  }
  func.func @transform_1(%arg0: i32) -> (i32, i32) {
    %c0_i32 = arith.constant 0 : i32
    %c0_i32_0 = arith.constant 0 : i32
    return %arg0, %c0_i32 : i32, i32
  }
  func.func @transform_2(%arg0: i32) -> (i32, i32) {
    %c0_i32 = arith.constant 0 : i32
    %c0_i32_0 = arith.constant 0 : i32
    return %arg0, %c0_i32 : i32, i32
  }
}

</mosaic_0001>

<llo_original>
// kernel: tpu_custom_call.1
$region0: #{tpu_custom_call.1}
  #allocation0 [shape = 'u32[]', space=smem, size = 0x4, offset = 0x4, fixed_abs, tag = 'smem constant byte address 0x4 - core index']
  #allocation1 [shape = 'u32[72,128]{1,0:T(1,128)}', space=vmem, size = 0x9000, scoped, tag = 'internal scratch']
  %s0 = inlined_call_operand.hbm [shape: f32[8,256], index: 0, kind: input, shape index: {}]
  %s1 = inlined_call_operand.vmem [shape: f32[8,2], index: 1, kind: input, shape index: {}]
  %s2 = inlined_call_operand.hbm [shape: f32[8,256], index: 2, kind: output, shape index: {}]
  %s3 = sld [smem:[#allocation0]]
  $region22: #{tpu_custom_call.1} parent=0
    _
  %s5 = ssub.s32 1, %s3
  %s6 = scalar_select 0, %s5, %s3
  $region1: #{tpu_custom_call.1} parent=0
    #allocation2 [shape = 'u8[8192]{0}', space=vmem, size = 0x2000, scoped, tag = 'input window, operand 0, single buffered']
    #allocation3 [shape = 's32[1]{0}', space=sflag, size = 0x4, scoped, tag = 'scoped memory for tpu_custom_call.1']
    #allocation4 [shape = 's32[1]{0}', space=sflag, size = 0x4, scoped, tag = 'scoped memory for tpu_custom_call.1']
    #allocation5 [shape = 'u8[8192]{0}', space=vmem, size = 0x2000, scoped, tag = 'output window, operand 0, single buffered']
    %7 = vsyncpa [#allocation3], 0
    %8 = vsyncpa [#allocation4], 0
    // Predicated region
    $region2: #{tpu_custom_call.1} parent=1 // pred_check
      _
    $region3: #{tpu_custom_call.1} parent=1 // pred_check_branch
      %10 = sbr.rel (0) target = $region5
    $region4: #{tpu_custom_call.1} parent=1 // pred_region
      %12 = vsyncadd [#allocation3], 0
      %s14 = sshll.u32 %s0, 4
      %s15 = int_to_ptr.hbm [resolvable:$true] %s14
      %s16 = sshll.u32 [#allocation2], 4
      %s17 = int_to_ptr.vmem [resolvable:$true] %s16
      %19 = dma.hbm_to_vmem [thread:$0]  %s15, 256, %s17, [#allocation3]
    $region5: #{tpu_custom_call.1} parent=1 // pred_fallthru
      _
    // Predicated region
    $region6: #{tpu_custom_call.1} parent=1 // pred_check
      _
    $region7: #{tpu_custom_call.1} parent=1 // pred_check_branch
      %21 = sbr.rel (0) target = $region9
    $region8: #{tpu_custom_call.1} parent=1 // pred_region
      _
    $region9: #{tpu_custom_call.1} parent=1 // pred_fallthru
      _
    // Predicated region
    $region10: #{tpu_custom_call.1} parent=1 // pred_check
      _
    $region11: #{tpu_custom_call.1} parent=1 // pred_check_branch
      %23 = sbr.rel (0) target = $region13
    $region12: #{tpu_custom_call.1} parent=1 // pred_region
      %25 = dma.done [#allocation3], 256
    $region13: #{tpu_custom_call.1} parent=1 // pred_fallthru
      _
    %v26 = vld [vmem:[#allocation2] sm:$0xff]
    %v27 = vld [vmem:[#allocation2 + $0x8] sm:$0xff]
    %v28 = vadd.f32 %v26, %v27
    %29 = vadd.xlane.f32.xlu0 %v28
    %v30 = vpop.xlane.xlu0 %29
    %v31 = vmul.f32 %v30, 0.00390625
    %v32 = vsub.f32 %v26, %v31
    %v33 = vsub.f32 %v27, %v31
    %v34 = vmul.f32 %v32, %v32
    %v35 = vmul.f32 %v33, %v33
    %v36 = vadd.f32 %v34, %v35
    %37 = vadd.xlane.f32.xlu0 %v36
    %v38 = vpop.xlane.xlu0 %37
    %v39 = vmul.f32 %v38, 0.00390625
    %v40 = vadd.f32 %v39, 1e-05
    %v41 = vrsqrt.pop %v40
    %v42 = vmul.f32 %v41, %v40
    %v43 = vmul.f32 %v42, %v41
    %v44 = vmul.f32 0.5, %v43
    %v45 = vsub.f32 1.5, %v44
    %v46 = vmul.f32 %v41, %v45
    %vm47 = vweird.f32 %v40
    %vm48 = vweird.f32 %v41
    %vm49 = vmor %vm47, %vm48
    %v50 = vsel %vm49, %v41, %v46
    %v51 = vld [vmem:[%s1] sm:$0xff]
    %v52 = vmul.f32 %v51, %v50
    %54 = vset.pattern.permute.xlu0 0
    %55 = vperm.xlu0 %54, %v52
    %v56 = vpop.permute.xlu0 %55
    %v58 = vmul.f32 %v32, %v56
    %v59 = vmul.f32 %v33, %v56
    %61 = vset.pattern.permute.xlu0 1
    %62 = vperm.xlu0 %61, %v51
    %v63 = vpop.permute.xlu0 %62
    %v65 = vadd.f32 %v58, %v63
    %v66 = vadd.f32 %v59, %v63
    %67 = vst [vmem:[#allocation5] sm:$0xff] %v65
    %68 = vst [vmem:[#allocation5 + $0x8] sm:$0xff] %v66
    // Predicated region
    $region14: #{tpu_custom_call.1} parent=1 // pred_check
      _
    $region15: #{tpu_custom_call.1} parent=1 // pred_check_branch
      %70 = sbr.rel (0) target = $region17
    $region16: #{tpu_custom_call.1} parent=1 // pred_region
      %72 = vsyncadd [#allocation4], 0
      %s74 = sshll.u32 [#allocation5], 4
      %s75 = int_to_ptr.vmem [resolvable:$true] %s74
      %s76 = sshll.u32 %s2, 4
      %s77 = int_to_ptr.hbm [resolvable:$true] %s76
      %79 = dma.vmem_to_hbm [thread:$0]  %s75, 256, %s77, [#allocation4]
    $region17: #{tpu_custom_call.1} parent=1 // pred_fallthru
      _
    // Predicated region
    $region18: #{tpu_custom_call.1} parent=1 // pred_check
      _
    $region19: #{tpu_custom_call.1} parent=1 // pred_check_branch
      %81 = sbr.rel (0) target = $region21
    $region20: #{tpu_custom_call.1} parent=1 // pred_region
      %83 = dma.done [#allocation4], 256
    $region21: #{tpu_custom_call.1} parent=1 // pred_fallthru
      _
    %84 = vsyncpa [#allocation3], 1
    %85 = vsyncpa [#allocation4], 1

</llo_original>
